<compile_context>
chip_gen: v6e
topology: v6e:2x2x1
jax: 0.10.0
libtpu: 0.0.40
codegen_flags: <defaults>
</compile_context>

<pallas_src>
import functools

import jax
import jax.numpy as jnp
from jax import lax
from jax.experimental import pallas as pl
from jax.experimental.pallas import tpu as pltpu


def _wmse_kernel(cw_ref, sample_ref, target_ref, out_ref, acc_ref, *,
                 num_classes, valid_rows, need_mask):
    i = pl.program_id(1)  # reduction axis (inner, "arbitrary")

    @pl.when(i == 0)
    def _():
        acc_ref[...] = jnp.zeros_like(acc_ref)

    s = sample_ref[...].astype(jnp.float32)
    t_nat = target_ref[...]
    diff = s - t_nat.astype(jnp.float32)
    sq_err = diff * diff

    # class_weight[target] via a static select chain.  Start from the class-0
    # weight and compare against classes 1..C-1 directly in the target's
    # native dtype (indices are exact; no int cast needed).  Scalar SMEM reads
    # are hoisted once per grid step.
    w = jnp.full(sq_err.shape, cw_ref[0], dtype=jnp.float32)
    for c in range(1, num_classes):
        w = jnp.where(t_nat == c, cw_ref[c], w)

    wsq = sq_err * w  # (tile_rows, 128) f32

    if need_mask:
        # Zero out rows past the real extent of the input (partial last block
        # and/or redundant clamped blocks).  Use a select (not multiply) so
        # garbage/NaN reads in out-of-bounds rows cannot propagate.
        tr = wsq.shape[0]
        block = pl.program_id(0) * pl.num_programs(1) + i
        row0 = block * tr
        row_ids = row0 + lax.broadcasted_iota(jnp.int32, wsq.shape, 0)
        wsq = jnp.where(row_ids < valid_rows, wsq, 0.0)

    tr = wsq.shape[0]
    # Fold sublane groups into the (8,128) accumulator: pure VPU adds,
    # no cross-lane/XLU work in the steady state.
    acc_ref[...] += jnp.sum(wsq.reshape(tr // 8, 8, 128), axis=0)

    @pl.when(i == pl.num_programs(1) - 1)
    def _():
        # Single cross-sublane reduce per outer (parallel) index -> lane-dense
        # (1,128) partial-sum row.  Final sum + mean divide in the wrapper.
        out_ref[...] = jnp.sum(acc_ref[...], axis=0, keepdims=True)


def _min_sublane(dtype):
    bits = jnp.dtype(dtype).itemsize * 8
    return max(8, 256 // bits)   # f32 -> 8, bf16 -> 16, 8-bit -> 32


def _round_up(x, m):
    return ((x + m - 1) // m) * m


def _default_split():
    # Multi-TensorCore-per-device chips (v7x, and v4/v5p megacore) benefit
    # from sharding the parallel outer axis across both TCs.  Single-TC chips
    # (v5e/v6e) keep split=1 so tiles stay as large as possible.
    try:
        kind = jax.devices()[0].device_kind.lower()
    except Exception:
        return 1
    return 2 if any(tag in kind for tag in ("v7", "v5p", "v4")) else 1


def weighted_mse_loss(sample, target, class_weight, *, tile_rows=None, split=None):
    """sample/target: same shape (native float dtype ok); class_weight: (C,)."""
    assert sample.shape == target.shape
    total_elems = sample.size
    assert total_elems > 0
    lanes = 128

    class_weight = class_weight.astype(jnp.float32)
    num_classes = int(class_weight.shape[0])

    if split is None:
        split = _default_split()

    # Block-shape sublane granularity for the (packed) input dtypes.
    sub = max(_min_sublane(sample.dtype), _min_sublane(target.dtype))

    if tile_rows is None:
        # ~1 MiB per input block (2048 rows f32 / 4096 rows bf16): sits on the
        # measured ~85% HBM-roofline plateau; buffered inputs (2 x 2 x 1 MiB)
        # plus in-kernel f32 temporaries stay well under the 32 MiB scoped
        # VMEM requested below (v7x physical is 64 MiB).
        itemsize = max(jnp.dtype(sample.dtype).itemsize,
                       jnp.dtype(target.dtype).itemsize)
        tile_rows = max(sub, (1 << 20) // (lanes * itemsize))

    flat_s = sample.reshape(-1)
    flat_t = target.reshape(-1)
    # Lane alignment only: pad <=127 elements when numel % 128 != 0 (zero pads
    # contribute (0-0)^2 = 0).  No pad to the block/grid boundary -- that
    # raggedness is masked inside the kernel instead.
    if total_elems % lanes != 0:
        pad = lanes - total_elems % lanes
        flat_s = jnp.pad(flat_s, (0, pad))
        flat_t = jnp.pad(flat_t, (0, pad))
    rows = flat_s.shape[0] // lanes

    per_core_rows = pl.cdiv(rows, split)
    tile_rows_eff = _round_up(min(tile_rows, _round_up(per_core_rows, sub)), sub)

    num_blocks = pl.cdiv(rows, tile_rows_eff)
    inner = pl.cdiv(num_blocks, split)
    covered_rows = split * inner * tile_rows_eff
    need_mask = covered_rows != rows
    last_block = num_blocks - 1

    sample2d = flat_s.reshape(rows, lanes)   # native dtype slabs
    target2d = flat_t.reshape(rows, lanes)

    if split * inner == num_blocks:
        def data_index_map(p, i):
            return (p * inner + i, 0)
    else:
        def data_index_map(p, i):
            # Clamp so redundant trailing grid steps (num_blocks % split != 0)
            # re-read the last valid block instead of indexing past the array;
            # their contribution is zeroed by the in-kernel row mask.
            return (jnp.minimum(p * inner + i, last_block), 0)

    data_spec = pl.BlockSpec((tile_rows_eff, lanes), data_index_map)

    kernel = functools.partial(
        _wmse_kernel,
        num_classes=num_classes,
        valid_rows=rows,
        need_mask=need_mask,
    )

    partials = pl.pallas_call(
        kernel,
        out_shape=jax.ShapeDtypeStruct((split, lanes), jnp.float32),
        grid_spec=pltpu.PrefetchScalarGridSpec(
            num_scalar_prefetch=0,
            grid=(split, inner),
            in_specs=[
                # small class-weight vector, whole in SMEM
                pl.BlockSpec(memory_space=pltpu.MemorySpace.SMEM),
                data_spec,
                data_spec,
            ],
            out_specs=pl.BlockSpec((1, lanes), lambda p, i: (p, 0)),
            scratch_shapes=[pltpu.VMEM((8, lanes), jnp.float32)],
        ),
        compiler_params=pltpu.CompilerParams(
            # Outer axis parallel (v7x two-TC sharding; harmless on 1-TC
            # chips), inner axis is the sequential reduction.
            dimension_semantics=("parallel", "arbitrary"),
            # Explicit scoped-VMEM budget: comfortably holds 4 x ~1 MiB
            # double-buffered input blocks plus f32 temporaries on every
            # generation (v5e default scoped is only 16 MiB).
            vmem_limit_bytes=32 * 1024 * 1024,
        ),
    )(class_weight, sample2d, target2d)

    # Finish the mean outside the kernel (exact divide, one tiny reduce).
    return jnp.sum(partials) / total_elems


if __name__ == "__main__":
    key = jax.random.PRNGKey(0)
    k1, k2 = jax.random.split(key)

    # Small shapes consistent with an NCHW prediction/target pair.
    B, C, H, W = 2, 4, 16, 16          # 2048 elements
    num_classes = 3

    # Deterministic "parameters": class weights defined in-script.
    class_weight = jnp.array([1.0, 2.5, 0.5], dtype=jnp.float32)

    # target holds class indices stored as float (as implied by target.long()).
    target = jax.random.randint(k1, (B, C, H, W), 0, num_classes).astype(jnp.float32)
    sample = target + 0.1 * jax.random.normal(k2, (B, C, H, W), dtype=jnp.float32)

    loss = weighted_mse_loss(sample, target, class_weight)
    loss = jax.block_until_ready(loss)

    # Pure-JAX reference check.
    ref = jnp.mean(((sample - target) ** 2) *
                   class_weight[target.astype(jnp.int32)])
    assert jnp.allclose(loss, ref, rtol=1e-5, atol=1e-6), (loss, ref)

    print("KERNEL_OK")
</pallas_src>

<mosaic_0001>
module attributes {stable_mosaic.version = 11 : i64} {
  func.func @_wmse_kernel(%arg0: i32, %arg1: i32, %arg2: memref<3xf32, #tpu.memory_space<smem>>, %arg3: memref<16x128xf32, #tpu.memory_space<vmem>>, %arg4: memref<16x128xf32, #tpu.memory_space<vmem>>, %arg5: memref<1x128xf32, #tpu.memory_space<vmem>>, %arg6: memref<8x128xf32, #tpu.memory_space<vmem>>) attributes {dimension_semantics = [#tpu.dimension_semantics<parallel>, #tpu.dimension_semantics<arbitrary>], iteration_bounds = array<i64: 1, 1>, scalar_prefetch = 0 : i64, scratch_operands = 1 : i64, tpu.core_type = #tpu.core_type<tc>, window_params = [{transform_indices = @transform_0, window_bounds = array<i64: 3>}, {transform_indices = @transform_1, window_bounds = array<i64: 16, 128>}, {transform_indices = @transform_2, window_bounds = array<i64: 16, 128>}, {transform_indices = @transform_3, window_bounds = array<i64: 1, 128>}]} {
    %c0_i32 = arith.constant 0 : i32
    %0 = arith.cmpi eq, %arg1, %c0_i32 : i32
    %1 = arith.extui %0 : i1 to i32
    %c0_i32_0 = arith.constant 0 : i32
    %2 = arith.cmpi ne, %1, %c0_i32_0 : i32
    scf.if %2 {
      %cst_13 = arith.constant 0.000000e+00 : f32
      %28 = vector.broadcast %cst_13 : f32 to vector<8x128xf32>
      %c0_14 = arith.constant 0 : index
      %c0_15 = arith.constant 0 : index
      %29 = vector.load %arg6[%c0_14, %c0_15] : memref<8x128xf32, #tpu.memory_space<vmem>>, vector<8x128xf32>
      tpu.vector_store %arg6[%c0_14, %c0_15], %28 {strides = array<i32>} : memref<8x128xf32, #tpu.memory_space<vmem>>, vector<8x128xf32>,
    } else {
    }
    %c0 = arith.constant 0 : index
    %c0_1 = arith.constant 0 : index
    %3 = vector.load %arg3[%c0, %c0_1] : memref<16x128xf32, #tpu.memory_space<vmem>>, vector<16x128xf32>
    %c0_2 = arith.constant 0 : index
    %c0_3 = arith.constant 0 : index
    %4 = vector.load %arg4[%c0_2, %c0_3] : memref<16x128xf32, #tpu.memory_space<vmem>>, vector<16x128xf32>
    %5 = arith.subf %3, %4 : vector<16x128xf32>
    %6 = arith.mulf %5, %5 : vector<16x128xf32>
    %c0_4 = arith.constant 0 : index
    %7 = memref.load %arg2[%c0_4] : memref<3xf32, #tpu.memory_space<smem>>
    %8 = vector.broadcast %7 : f32 to vector<16x128xf32>
    %cst = arith.constant 1.000000e+00 : f32
    %9 = vector.broadcast %cst : f32 to vector<16x128xf32>
    %10 = arith.cmpf oeq, %4, %9 : vector<16x128xf32>
    %c1 = arith.constant 1 : index
    %11 = memref.load %arg2[%c1] : memref<3xf32, #tpu.memory_space<smem>>
    %12 = vector.broadcast %11 : f32 to vector<16x128xf32>
    %13 = arith.select %10, %12, %8 : vector<16x128xi1>, vector<16x128xf32>
    %cst_5 = arith.constant 2.000000e+00 : f32
    %14 = vector.broadcast %cst_5 : f32 to vector<16x128xf32>
    %15 = arith.cmpf oeq, %4, %14 : vector<16x128xf32>
    %c2 = arith.constant 2 : index
    %16 = memref.load %arg2[%c2] : memref<3xf32, #tpu.memory_space<smem>>
    %17 = vector.broadcast %16 : f32 to vector<16x128xf32>
    %18 = arith.select %15, %17, %13 : vector<16x128xi1>, vector<16x128xf32>
    %19 = arith.mulf %6, %18 : vector<16x128xf32>
    %c0_6 = arith.constant 0 : index
    %c0_7 = arith.constant 0 : index
    %20 = vector.load %arg6[%c0_6, %c0_7] : memref<8x128xf32, #tpu.memory_space<vmem>>, vector<8x128xf32>
    %21 = vector.shape_cast %19 : vector<16x128xf32> to vector<2x8x128xf32>
    %cst_8 = arith.constant dense<0.000000e+00> : vector<8x128xf32>
    %22 = vector.multi_reduction <add>, %21, %cst_8 [0] : vector<2x8x128xf32> to vector<8x128xf32>
    %23 = arith.addf %20, %22 : vector<8x128xf32>
    %c0_9 = arith.constant 0 : index
    %c0_10 = arith.constant 0 : index
    %24 = vector.load %arg6[%c0_9, %c0_10] : memref<8x128xf32, #tpu.memory_space<vmem>>, vector<8x128xf32>
    tpu.vector_store %arg6[%c0_9, %c0_10], %23 {strides = array<i32>} : memref<8x128xf32, #tpu.memory_space<vmem>>, vector<8x128xf32>,
    %c0_i32_11 = arith.constant 0 : i32
    %25 = arith.cmpi eq, %arg1, %c0_i32_11 : i32
    %26 = arith.extui %25 : i1 to i32
    %c0_i32_12 = arith.constant 0 : i32
    %27 = arith.cmpi ne, %26, %c0_i32_12 : i32
    scf.if %27 {
      %c0_13 = arith.constant 0 : index
      %c0_14 = arith.constant 0 : index
      %28 = vector.load %arg6[%c0_13, %c0_14] : memref<8x128xf32, #tpu.memory_space<vmem>>, vector<8x128xf32>
      %cst_15 = arith.constant dense<0.000000e+00> : vector<128xf32>
      %29 = vector.multi_reduction <add>, %28, %cst_15 [0] : vector<8x128xf32> to vector<128xf32>
      %30 = vector.shape_cast %29 : vector<128xf32> to vector<1x128xf32>
      %c0_16 = arith.constant 0 : index
      %c0_17 = arith.constant 0 : index
      %31 = vector.load %arg5[%c0_16, %c0_17] : memref<1x128xf32, #tpu.memory_space<vmem>>, vector<1x128xf32>
      tpu.vector_store %arg5[%c0_16, %c0_17], %30 {strides = array<i32>} : memref<1x128xf32, #tpu.memory_space<vmem>>, vector<1x128xf32>,
    } else {
    }
    return
  }
  func.func @transform_0(%arg0: i32, %arg1: i32) -> i32 {
    %c0_i32 = arith.constant 0 : i32
    %c0_i32_0 = arith.constant 0 : i32
    return %c0_i32 : i32
  }
  func.func @transform_1(%arg0: i32, %arg1: i32) -> (i32, i32) {
    %c1_i32 = arith.constant 1 : i32
    %0 = arith.muli %arg0, %c1_i32 : i32
    %1 = arith.addi %0, %arg1 : i32
    %c0_i32 = arith.constant 0 : i32
    %c0_i32_0 = arith.constant 0 : i32
    return %1, %c0_i32 : i32, i32
  }
  func.func @transform_2(%arg0: i32, %arg1: i32) -> (i32, i32) {
    %c1_i32 = arith.constant 1 : i32
    %0 = arith.muli %arg0, %c1_i32 : i32
    %1 = arith.addi %0, %arg1 : i32
    %c0_i32 = arith.constant 0 : i32
    %c0_i32_0 = arith.constant 0 : i32
    return %1, %c0_i32 : i32, i32
  }
  func.func @transform_3(%arg0: i32, %arg1: i32) -> (i32, i32) {
    %c0_i32 = arith.constant 0 : i32
    %c0_i32_0 = arith.constant 0 : i32
    return %arg0, %c0_i32 : i32, i32
  }
}

</mosaic_0001>

<llo_original>
// kernel: tpu_custom_call.1
$region0: #{tpu_custom_call.1}
  #allocation0 [shape = 'u32[]', space=smem, size = 0x4, offset = 0x4, fixed_abs, tag = 'smem constant byte address 0x4 - core index']
  #allocation1 [shape = 'u32[144,128]{1,0:T(1,128)}', space=vmem, size = 0x12000, scoped, tag = 'internal scratch']
  #allocation2 [shape = 'f32[8,128]{1,0:T(8,128)}', space=vmem, size = 0x1000, scoped, tag = 'scratch operand']
  %s0 = inlined_call_operand.hbm [shape: f32[3], index: 0, kind: input, shape index: {}]
  %s1 = inlined_call_operand.hbm [shape: f32[16,128], index: 1, kind: input, shape index: {}]
  %s2 = inlined_call_operand.hbm [shape: f32[16,128], index: 2, kind: input, shape index: {}]
  %s3 = inlined_call_operand.hbm [shape: f32[1,128], index: 3, kind: output, shape index: {}]
  %s4 = sld [smem:[#allocation0]]
  $region42: #{tpu_custom_call.1} parent=0
    _
  %s6 = ssub.s32 1, %s4
  %s7 = scalar_select 0, %s6, %s4
  $region1: #{tpu_custom_call.1} parent=0
    #allocation3 [shape = 'u8[512]{0}', space=smem, size = 0x200, scoped, tag = 'input window, operand 0, single buffered']
    #allocation4 [shape = 's32[1]{0}', space=sflag, size = 0x4, scoped, tag = 'scoped memory for tpu_custom_call.1']
    #allocation5 [shape = 's32[1]{0}', space=sflag, size = 0x4, scoped, tag = 'scoped memory for tpu_custom_call.1']
    #allocation6 [shape = 's32[1]{0}', space=sflag, size = 0x4, scoped, tag = 'scoped memory for tpu_custom_call.1']
    #allocation7 [shape = 'u8[8192]{0}', space=vmem, size = 0x2000, scoped, tag = 'input window, operand 1, single buffered']
    #allocation8 [shape = 'u8[8192]{0}', space=vmem, size = 0x2000, scoped, tag = 'input window, operand 2, single buffered']
    #allocation9 [shape = 's32[1]{0}', space=sflag, size = 0x4, scoped, tag = 'scoped memory for tpu_custom_call.1']
    #allocation10 [shape = 'u8[512]{0}', space=vmem, size = 0x400, scoped, tag = 'output window, operand 0, single buffered']
    %8 = vsyncpa [#allocation6], 0
    %9 = vsyncpa [#allocation4], 0
    %10 = vsyncpa [#allocation9], 0
    %11 = vsyncpa [#allocation5], 0
    // Predicated region
    $region2: #{tpu_custom_call.1} parent=1 // pred_check
      _
    $region3: #{tpu_custom_call.1} parent=1 // pred_check_branch
      %13 = sbr.rel (0) target = $region5
    $region4: #{tpu_custom_call.1} parent=1 // pred_region
      %s15 = ssub.s32 16, 16
      %16 = vsyncadd [#allocation6], %s15
      %19 = dma.hbm_to_smem %s0, 16, [#allocation3], [#allocation6]
    $region5: #{tpu_custom_call.1} parent=1 // pred_fallthru
      _
    // Predicated region
    $region6: #{tpu_custom_call.1} parent=1 // pred_check
      _
    $region7: #{tpu_custom_call.1} parent=1 // pred_check_branch
      %21 = sbr.rel (0) target = $region9
    $region8: #{tpu_custom_call.1} parent=1 // pred_region
      %s22 = sadd.s32 0, 0
      %s23 = smul.u32 2, %s22
      %s25 = ssub.s32 256, 256
      %26 = vsyncadd [#allocation4], %s25
      %s27 = smul.addr %s23, 128
      %s28 = scalar_lea.hbm %s1, %s27
      %s29 = sshll.u32 [#allocation7], 4
      %s30 = int_to_ptr.vmem [resolvable:$true] %s29
      %35 = dma.hbm_to_vmem [thread:$0]  %s28, 256, %s30, [#allocation4], 128, 128, 8
    $region9: #{tpu_custom_call.1} parent=1 // pred_fallthru
      _
    // Predicated region
    $region10: #{tpu_custom_call.1} parent=1 // pred_check
      _
    $region11: #{tpu_custom_call.1} parent=1 // pred_check_branch
      %37 = sbr.rel (0) target = $region13
    $region12: #{tpu_custom_call.1} parent=1 // pred_region
      %s38 = sadd.s32 0, 0
      %s39 = smul.u32 2, %s38
      %s41 = ssub.s32 256, 256
      %42 = vsyncadd [#allocation9], %s41
      %s43 = smul.addr %s39, 128
      %s44 = scalar_lea.hbm %s2, %s43
      %s45 = sshll.u32 [#allocation8], 4
      %s46 = int_to_ptr.vmem [resolvable:$true] %s45
      %51 = dma.hbm_to_vmem [thread:$0]  %s44, 256, %s46, [#allocation9], 128, 128, 8
    $region13: #{tpu_custom_call.1} parent=1 // pred_fallthru
      _
    // Predicated region
    $region14: #{tpu_custom_call.1} parent=1 // pred_check
      _
    $region15: #{tpu_custom_call.1} parent=1 // pred_check_branch
      %53 = sbr.rel (0) target = $region17
    $region16: #{tpu_custom_call.1} parent=1 // pred_region
      %54 = dma.done [#allocation6], 16
    $region17: #{tpu_custom_call.1} parent=1 // pred_fallthru
      _
    // Predicated region
    $region18: #{tpu_custom_call.1} parent=1 // pred_check
      _
    $region19: #{tpu_custom_call.1} parent=1 // pred_check_branch
      %56 = sbr.rel (0) target = $region21
    $region20: #{tpu_custom_call.1} parent=1 // pred_region
      %57 = dma.done [#allocation4], 256
    $region21: #{tpu_custom_call.1} parent=1 // pred_fallthru
      _
    // Predicated region
    $region22: #{tpu_custom_call.1} parent=1 // pred_check
      _
    $region23: #{tpu_custom_call.1} parent=1 // pred_check_branch
      %59 = sbr.rel (0) target = $region25
    $region24: #{tpu_custom_call.1} parent=1 // pred_region
      %60 = dma.done [#allocation9], 256
    $region25: #{tpu_custom_call.1} parent=1 // pred_fallthru
      _
    %61 = sfence
    %s62 = sadd.s32 0, 0
    %s63 = smul.u32 2, %s62
    %s64 = sadd.s32 0, 0
    %s65 = smul.u32 2, %s64
    %p66 = scmp.eq.s32.totalorder 0, 0
    // Predicated region
    $region26: #{tpu_custom_call.1} parent=1 // pred_check
      %p67 = pneg %p66
    $region27: #{tpu_custom_call.1} parent=1 // pred_check_branch
      %69 = sbr.rel (%p67) target = $region29
    $region28: #{tpu_custom_call.1} parent=1 // pred_region
      %70 = vst [vmem:[#allocation2] sm:$0xff] 0.0
    $region29: #{tpu_custom_call.1} parent=1 // pred_fallthru
      _
    %v71 = vld [vmem:[#allocation7] sm:$0xff]
    %v72 = vld [vmem:[#allocation7 + $0x8] sm:$0xff]
    %v73 = vld [vmem:[#allocation8] sm:$0xff]
    %v74 = vld [vmem:[#allocation8 + $0x8] sm:$0xff]
    %v75 = vsub.f32 %v71, %v73
    %v76 = vsub.f32 %v72, %v74
    %v77 = vmul.f32 %v75, %v75
    %v78 = vmul.f32 %v76, %v76
    %s79 = sld [smem:[#allocation3]]
    %v80 = vstv %s79
    %vm81 = vcmp.eq.f32.partialorder %v73, 1.0
    %vm82 = vcmp.eq.f32.partialorder %v74, 1.0
    %s83 = sld [smem:[#allocation3 + $0x1]]
    %v84 = vstv %s83
    %v85 = vsel %vm81, %v84, %v80
    %v86 = vsel %vm82, %v84, %v80
    %vm87 = vcmp.eq.f32.partialorder %v73, 2.0
    %vm88 = vcmp.eq.f32.partialorder %v74, 2.0
    %s89 = sld [smem:[#allocation3 + $0x2]]
    %v90 = vstv %s89
    %v91 = vsel %vm87, %v90, %v85
    %v92 = vsel %vm88, %v90, %v86
    %v93 = vmul.f32 %v77, %v91
    %v94 = vmul.f32 %v78, %v92
    %v95 = vld [vmem:[#allocation2] sm:$0xff]
    %v96 = vadd.f32 %v93, %v94
    %v97 = vadd.f32 %v95, %v96
    %98 = vst [vmem:[#allocation2] sm:$0xff] %v97
    // Predicated region
    $region30: #{tpu_custom_call.1} parent=1 // pred_check
      %p99 = pneg %p66
    $region31: #{tpu_custom_call.1} parent=1 // pred_check_branch
      %101 = sbr.rel (%p99) target = $region33
    $region32: #{tpu_custom_call.1} parent=1 // pred_region
      %v102 = vld [vmem:[#allocation2] sm:$0xff]
      %v103 = vrot.slane %v102, 4
      %v104 = vadd.f32 %v102, %v103
      %v105 = vrot.slane %v104, 2
      %v106 = vadd.f32 %v104, %v105
      %v107 = vrot.slane %v106, 1
      %v108 = vadd.f32 %v106, %v107
      %109 = vst [vmem:[#allocation10] sm:$0x1] %v108
    $region33: #{tpu_custom_call.1} parent=1 // pred_fallthru
      _
    // Predicated region
    $region34: #{tpu_custom_call.1} parent=1 // pred_check
      _
    $region35: #{tpu_custom_call.1} parent=1 // pred_check_branch
      %111 = sbr.rel (0) target = $region37
    $region36: #{tpu_custom_call.1} parent=1 // pred_region
      %s113 = ssub.s32 16, 16
      %114 = vsyncadd [#allocation5], %s113
      %s116 = sshll.u32 [#allocation10], 4
      %s117 = int_to_ptr.vmem [resolvable:$true] %s116
      %119 = dma.vmem_to_hbm [thread:$0]  %s117, 16, %s3, [#allocation5]
    $region37: #{tpu_custom_call.1} parent=1 // pred_fallthru
      _
    // Predicated region
    $region38: #{tpu_custom_call.1} parent=1 // pred_check
      _
    $region39: #{tpu_custom_call.1} parent=1 // pred_check_branch
      %121 = sbr.rel (0) target = $region41
    $region40: #{tpu_custom_call.1} parent=1 // pred_region
      %122 = dma.done [#allocation5], 16
    $region41: #{tpu_custom_call.1} parent=1 // pred_fallthru
      _
    %123 = vsyncpa [#allocation4], 1
    %124 = vsyncpa [#allocation9], 1
    %125 = vsyncpa [#allocation5], 1
    %126 = vsyncpa [#allocation6], 1

</llo_original>
